<compile_context>
chip_gen: v7x
topology: tpu7x:2x2x1
jax: 0.10.0
libtpu: 0.0.40
codegen_flags: <defaults>
</compile_context>

<pallas_src>
import jax
import jax.numpy as jnp
from jax import lax
from jax.experimental import pallas as pl
from jax.experimental.pallas import tpu as pltpu


_EPS2 = 1e-24  # F.normalize eps=1e-12:  1/max(||x||, eps) == rsqrt(max(||x||^2, eps^2))


def _round_up(x, m):
    return (x + m - 1) // m * m


def _adaptive_avg_pool2d(x, out_hw):
    """Plain-JAX glue for F.adaptive_avg_pool2d (evenly-divisible case)."""
    B, C, H, W = x.shape
    oh, ow = out_hw
    if H == oh and W == ow:
        return x
    # TODO(synk): generic (non-divisible) adaptive pooling not implemented.
    assert H % oh == 0 and W % ow == 0, "adaptive pool requires divisible sizes"
    kh, kw = H // oh, W // ow
    x = x.reshape(B, C, oh, kh, ow, kw)
    return x.mean(axis=(3, 5))


def _vmem_capacity_bytes():
    """Physical VMEM per TensorCore; conservative fallback if unavailable."""
    try:
        cap = getattr(pltpu.get_tpu_info(), "vmem_capacity_bytes", None)
        if cap:
            return int(cap)
    except Exception:
        pass
    return 64 << 20  # v7x per-TensorCore VMEM (smallest current generation)


# ---------------------------------------------------------------------------
# Fused path (common case): full (C, C) Gram accumulators live in VMEM,
# normalization + per-batch reduction happen in the kernel epilogue.
# ---------------------------------------------------------------------------
def _make_fused_kernel(n_total, tn, needs_mask):
    def kernel(fs_ref, ft_ref, loss_ref, gs_acc, gt_acc):
        n = pl.program_id(1)
        n_last = pl.num_programs(1) - 1

        @pl.when(n == 0)
        def _init():
            gs_acc[...] = jnp.zeros_like(gs_acc)
            gt_acc[...] = jnp.zeros_like(gt_acc)

        fs = fs_ref[0]  # (C, TN), native dtype
        ft = ft_ref[0]
        if needs_mask:
            # Ragged last tile: zero lanes past the end of the spatial axis
            # (zero columns contribute nothing to F F^T).
            rem = jnp.int32(n_total) - n * jnp.int32(tn)
            keep = lax.broadcasted_iota(jnp.int32, fs.shape, 1) < rem
            fs = jnp.where(keep, fs, jnp.zeros_like(fs))
            ft = jnp.where(keep, ft, jnp.zeros_like(ft))

        # F @ F^T as a last-dim/last-dim contraction (no explicit transpose);
        # f32 accumulation on the MXU.
        dn = (((1,), (1,)), ((), ()))
        gs_acc[...] += lax.dot_general(fs, fs, dimension_numbers=dn,
                                       preferred_element_type=jnp.float32)
        gt_acc[...] += lax.dot_general(ft, ft, dimension_numbers=dn,
                                       preferred_element_type=jnp.float32)

        @pl.when(n == n_last)
        def _finalize():
            gs = gs_acc[...]
            gt = gt_acc[...]
            c = gs.shape[0]
            eps2 = jnp.float32(_EPS2)
            rows = lax.broadcasted_iota(jnp.int32, (c, c), 0)
            cols = lax.broadcasted_iota(jnp.int32, (c, c), 1)
            eye = rows == cols
            gs_d = jnp.where(eye, gs, 0.0)  # diagonal == squared row norms
            gt_d = jnp.where(eye, gt, 0.0)
            inv_s_r = lax.rsqrt(jnp.maximum(jnp.sum(gs_d, axis=1, keepdims=True), eps2))
            inv_s_c = lax.rsqrt(jnp.maximum(jnp.sum(gs_d, axis=0, keepdims=True), eps2))
            inv_t_r = lax.rsqrt(jnp.maximum(jnp.sum(gt_d, axis=1, keepdims=True), eps2))
            inv_t_c = lax.rsqrt(jnp.maximum(jnp.sum(gt_d, axis=0, keepdims=True), eps2))
            # Apply the normalization by broadcasting the (C,1)/(1,C) factors;
            # never materialize a (C, C) scale matrix.
            diff = (gs * inv_s_r) * inv_s_c - (gt * inv_t_r) * inv_t_c
            part = jnp.sum(diff * diff)  # per-batch sum of squared differences
            # Lane-dense write; the wrapper reads lane 0 of each batch row.
            loss_ref[...] = jnp.full(loss_ref.shape, part, dtype=jnp.float32)

    return kernel


# ---------------------------------------------------------------------------
# Row-tiled path (large C): raw (TM, C) Gram blocks are accumulated in VMEM and
# written to HBM; normalization + MSE run as cheap JAX ops in the wrapper.
# ---------------------------------------------------------------------------
def _make_gram_kernel(n_total, tn, needs_mask):
    def kernel(fs_rows_ref, fs_full_ref, ft_rows_ref, ft_full_ref,
               gs_out_ref, gt_out_ref, gs_acc, gt_acc):
        n = pl.program_id(2)
        n_last = pl.num_programs(2) - 1

        @pl.when(n == 0)
        def _init():
            gs_acc[...] = jnp.zeros_like(gs_acc)
            gt_acc[...] = jnp.zeros_like(gt_acc)

        fs_r = fs_rows_ref[0]  # (TM, TN)
        fs_f = fs_full_ref[0]  # (C,  TN)
        ft_r = ft_rows_ref[0]
        ft_f = ft_full_ref[0]
        if needs_mask:
            rem = jnp.int32(n_total) - n * jnp.int32(tn)
            keep_f = lax.broadcasted_iota(jnp.int32, fs_f.shape, 1) < rem
            keep_r = lax.broadcasted_iota(jnp.int32, fs_r.shape, 1) < rem
            fs_f = jnp.where(keep_f, fs_f, jnp.zeros_like(fs_f))
            ft_f = jnp.where(keep_f, ft_f, jnp.zeros_like(ft_f))
            fs_r = jnp.where(keep_r, fs_r, jnp.zeros_like(fs_r))
            ft_r = jnp.where(keep_r, ft_r, jnp.zeros_like(ft_r))

        dn = (((1,), (1,)), ((), ()))
        gs_acc[...] += lax.dot_general(fs_r, fs_f, dimension_numbers=dn,
                                       preferred_element_type=jnp.float32)
        gt_acc[...] += lax.dot_general(ft_r, ft_f, dimension_numbers=dn,
                                       preferred_element_type=jnp.float32)

        @pl.when(n == n_last)
        def _finalize():
            gs_out_ref[0] = gs_acc[...]
            gt_out_ref[0] = gt_acc[...]

    return kernel


def nst_loss(g_s, g_t, *, max_block_bytes=None, max_gram_bytes=None):
    """NST loss between student feature map g_s and teacher feature map g_t.

    g_s, g_t: NCHW arrays with matching (B, C); spatial sizes may differ (the
    larger one is adaptively average-pooled down, as in the PyTorch module).
    max_block_bytes / max_gram_bytes are optional tuning / testing knobs that
    override the capacity-derived VMEM budgets.
    """
    s_H, t_H = g_s.shape[2], g_t.shape[2]
    if s_H > t_H:
        g_s = _adaptive_avg_pool2d(g_s, (g_t.shape[2], g_t.shape[3]))
    elif s_H < t_H:
        g_t = _adaptive_avg_pool2d(g_t, (g_s.shape[2], g_s.shape[3]))

    B, C, H, W = g_s.shape
    assert g_t.shape[:2] == (B, C)
    N = H * W
    # Keep the native dtype end-to-end (halves HBM traffic for bf16 inputs).
    # TODO(synk): if the producer runs in the same jit and emits f32, casting to
    # bf16 where it fuses upstream roughly halves this (HBM-bound) kernel.
    fs = g_s.reshape(B, C, N)
    ft = g_t.reshape(B, C, N)
    itemsize = max(jnp.dtype(fs.dtype).itemsize, jnp.dtype(ft.dtype).itemsize)

    # ---- capacity-derived budgets (v5e/v6e: 128 MiB VMEM, v7x: 64 MiB) ----
    cap = _vmem_capacity_bytes()
    usable = (cap * 3) // 4                      # keep double-buffering headroom
    headroom = 2 << 20
    gram_budget = max(8 << 20, usable // 3)
    if max_gram_bytes is not None:
        gram_budget = int(max_gram_bytes)
    target_block = (5 << 20) if cap >= (96 << 20) else (3 << 20)
    if max_block_bytes is not None:
        target_block = int(max_block_bytes)

    # ---- Gram row-tile TM (TM == C -> fully fused path) ----
    fused = 2 * C * C * 4 <= gram_budget
    if fused:
        TM = C
    else:
        TM = None
        for cand in (2048, 1024, 512, 256, 128, 64, 32, 16, 8):
            # 2x (TM, C) f32 scratch + 2 outputs x 2 buffers x (TM, C) f32 blocks
            if C % cand == 0 and 6 * cand * C * 4 <= gram_budget:
                TM = cand
                break
        if TM is None:
            # TODO(synk): C not divisible by any row-tile candidate; fall back to
            # the fused path and rely on vmem_limit (may not fit for huge C).
            TM = C
            fused = True
    m_tiles = C // TM

    # ---- spatial tile TN ----
    scratch_bytes = 2 * TM * C * 4
    out_bytes = 0 if fused else 4 * TM * C * 4
    n_inputs = 2 if fused else 4
    avail_blocks = usable - scratch_bytes - out_bytes - headroom
    per_block = min(target_block,
                    max(C * 128 * itemsize, avail_blocks // (2 * n_inputs)))
    tn_cap = max(128, min(per_block // max(C * itemsize, 1), 32768) // 128 * 128)
    n_pad = _round_up(N, 128)
    if n_pad <= tn_cap:
        TN = N                 # whole spatial extent in a single (lane-padded) block
        needs_mask = False
    else:
        TN = tn_cap            # 128-aligned tiles; mask the ragged last tile
        needs_mask = (N % TN) != 0
    n_tiles = pl.cdiv(N, TN)
    tn_padded = _round_up(TN, 128)

    # ---- pipelining depth & compiler params ----
    block_bytes = C * tn_padded * itemsize
    use_buf3 = (fused and n_tiles >= 4 and block_bytes <= (1 << 20)
                and (2 * 3 * block_bytes + scratch_bytes + headroom) <= usable)
    bufs = 3 if use_buf3 else 2
    if fused:
        est_in = 2 * bufs * C * tn_padded * itemsize
    else:
        est_in = bufs * 2 * (C + TM) * tn_padded * itemsize
    est = est_in + scratch_bytes + out_bytes + headroom

    sem = ("parallel", "arbitrary") if fused else ("parallel", "parallel", "arbitrary")
    compiler_kwargs = dict(dimension_semantics=sem)
    if est > (12 << 20):
        # Raise the scoped-VMEM limit, but never past ~75% of physical VMEM.
        compiler_kwargs["vmem_limit_bytes"] = int(min(max(est + (4 << 20), 16 << 20),
                                                      usable))

    if fused:
        in_kwargs = {"pipeline_mode": pl.Buffered(3)} if use_buf3 else {}
        kernel = _make_fused_kernel(N, TN, needs_mask)
        out = pl.pallas_call(
            kernel,
            out_shape=jax.ShapeDtypeStruct((B, 1, 128), jnp.float32),
            grid_spec=pltpu.PrefetchScalarGridSpec(
                num_scalar_prefetch=0,
                grid=(B, n_tiles),
                in_specs=[
                    pl.BlockSpec((1, C, TN), lambda b, n: (b, 0, n), **in_kwargs),
                    pl.BlockSpec((1, C, TN), lambda b, n: (b, 0, n), **in_kwargs),
                ],
                out_specs=pl.BlockSpec((1, 1, 128), lambda b, n: (b, 0, 0)),
                scratch_shapes=[
                    pltpu.VMEM((C, C), jnp.float32),
                    pltpu.VMEM((C, C), jnp.float32),
                ],
            ),
            compiler_params=pltpu.CompilerParams(**compiler_kwargs),
        )(fs, ft)
        # MSE over the B x C x C Gram entries.
        return jnp.sum(out[:, 0, 0]) / jnp.float32(B * C * C)

    # ---- large-C path: raw row-tiled Grams in-kernel, normalize in JAX ----
    # TODO(synk): for B == 1 on v7x a core-parallel split of the spatial axis in
    # the fused path would keep the second TensorCore busy; not implemented.
    kernel = _make_gram_kernel(N, TN, needs_mask)
    rows_spec = pl.BlockSpec((1, TM, TN), lambda b, m, n: (b, m, n))
    full_spec = pl.BlockSpec((1, C, TN), lambda b, m, n: (b, 0, n))
    gram_s, gram_t = pl.pallas_call(
        kernel,
        out_shape=(jax.ShapeDtypeStruct((B, C, C), jnp.float32),
                   jax.ShapeDtypeStruct((B, C, C), jnp.float32)),
        grid_spec=pltpu.PrefetchScalarGridSpec(
            num_scalar_prefetch=0,
            grid=(B, m_tiles, n_tiles),
            in_specs=[rows_spec, full_spec, rows_spec, full_spec],
            out_specs=[
                pl.BlockSpec((1, TM, C), lambda b, m, n: (b, m, 0)),
                pl.BlockSpec((1, TM, C), lambda b, m, n: (b, m, 0)),
            ],
            scratch_shapes=[
                pltpu.VMEM((TM, C), jnp.float32),
                pltpu.VMEM((TM, C), jnp.float32),
            ],
        ),
        compiler_params=pltpu.CompilerParams(**compiler_kwargs),
    )(fs, fs, ft, ft)

    def _normalize(g):
        d = jnp.sqrt(jnp.maximum(jnp.diagonal(g, axis1=1, axis2=2), 0.0))  # (B, C)
        inv = 1.0 / jnp.maximum(d, 1e-12)
        return g * inv[:, :, None] * inv[:, None, :]

    diff = _normalize(gram_s) - _normalize(gram_t)
    return jnp.mean(diff * diff)


def _nst_ref(g_s, g_t):
    """Pure-JAX reference (mirrors the PyTorch module) for correctness checks."""
    s_H, t_H = g_s.shape[2], g_t.shape[2]
    if s_H > t_H:
        g_s = _adaptive_avg_pool2d(g_s, (g_t.shape[2], g_t.shape[3]))
    elif s_H < t_H:
        g_t = _adaptive_avg_pool2d(g_t, (g_s.shape[2], g_s.shape[3]))
    B, C = g_s.shape[:2]
    fs = g_s.reshape(B, C, -1).astype(jnp.float32)
    ft = g_t.reshape(B, C, -1).astype(jnp.float32)
    fs = fs / jnp.maximum(jnp.linalg.norm(fs, axis=2, keepdims=True), 1e-12)
    ft = ft / jnp.maximum(jnp.linalg.norm(ft, axis=2, keepdims=True), 1e-12)
    gs = jnp.einsum("bcn,bdn->bcd", fs, fs)
    gt = jnp.einsum("bcn,bdn->bcd", ft, ft)
    return jnp.mean((gs - gt) ** 2)


if __name__ == "__main__":
    key = jax.random.PRNGKey(0)
    k1, k2, k3, k4, k5, k6, k7, k8 = jax.random.split(key, 8)

    cases = [
        # 1) baseline: equal spatial sizes, 128-aligned spatial extent.
        (jax.random.normal(k1, (2, 4, 16, 16), dtype=jnp.float32),
         jax.random.normal(k2, (2, 4, 16, 16), dtype=jnp.float32), {}),
        # 2) adaptive pooling (student 14x14 -> teacher 7x7) + N=49 that is not
        #    a multiple of 128 (single full-extent block).
        (jax.random.normal(k3, (2, 8, 14, 14), dtype=jnp.float32),
         jax.random.normal(k4, (2, 8, 7, 7), dtype=jnp.float32), {}),
        # 3) forced small spatial tile: multi-tile accumulation + ragged-last-
        #    tile lane mask (N=196, TN=128).
        (jax.random.normal(k5, (2, 8, 14, 14), dtype=jnp.float32),
         jax.random.normal(k6, (2, 8, 14, 14), dtype=jnp.float32),
         {"max_block_bytes": 8 * 128 * 4}),
        # 4) forced small Gram budget: exercises the row-tiled large-C path.
        (jax.random.normal(k7, (2, 64, 8, 8), dtype=jnp.float32),
         jax.random.normal(k8, (2, 64, 8, 8), dtype=jnp.float32),
         {"max_gram_bytes": 16 << 10}),
    ]

    for i, (a, b, kw) in enumerate(cases):
        loss = jax.block_until_ready(nst_loss(a, b, **kw))
        ref = jax.block_until_ready(_nst_ref(a, b))
        assert jnp.allclose(loss, ref, rtol=1e-3, atol=1e-6), (i, loss, ref)

    print("KERNEL_OK")
</pallas_src>

<mosaic_0001>
module attributes {stable_mosaic.version = 11 : i64} {
  func.func @kernel(%arg0: i32, %arg1: i32, %arg2: memref<1x4x256xf32, #tpu.memory_space<vmem>>, %arg3: memref<1x4x256xf32, #tpu.memory_space<vmem>>, %arg4: memref<1x1x128xf32, #tpu.memory_space<vmem>>, %arg5: memref<4x4xf32, #tpu.memory_space<vmem>>, %arg6: memref<4x4xf32, #tpu.memory_space<vmem>>) attributes {dimension_semantics = [#tpu.dimension_semantics<parallel>, #tpu.dimension_semantics<arbitrary>], iteration_bounds = array<i64: 2, 1>, scalar_prefetch = 0 : i64, scratch_operands = 2 : i64, tpu.core_type = #tpu.core_type<tc>, window_params = [{transform_indices = @transform_0, window_bounds = array<i64: 1, 4, 256>}, {transform_indices = @transform_1, window_bounds = array<i64: 1, 4, 256>}, {transform_indices = @transform_2, window_bounds = array<i64: 1, 1, 128>}]} {
    %c0_i32 = arith.constant 0 : i32
    %0 = arith.cmpi eq, %arg1, %c0_i32 : i32
    %1 = arith.extui %0 : i1 to i32
    %c0_i32_0 = arith.constant 0 : i32
    %2 = arith.cmpi ne, %1, %c0_i32_0 : i32
    scf.if %2 {
      %cst_17 = arith.constant 0.000000e+00 : f32
      %18 = vector.broadcast %cst_17 : f32 to vector<4x4xf32>
      %c0_18 = arith.constant 0 : index
      %c0_19 = arith.constant 0 : index
      %19 = vector.load %arg5[%c0_18, %c0_19] : memref<4x4xf32, #tpu.memory_space<vmem>>, vector<4x4xf32>
      tpu.vector_store %arg5[%c0_18, %c0_19], %18 {strides = array<i32>} : memref<4x4xf32, #tpu.memory_space<vmem>>, vector<4x4xf32>,
      %cst_20 = arith.constant 0.000000e+00 : f32
      %20 = vector.broadcast %cst_20 : f32 to vector<4x4xf32>
      %c0_21 = arith.constant 0 : index
      %c0_22 = arith.constant 0 : index
      %21 = vector.load %arg6[%c0_21, %c0_22] : memref<4x4xf32, #tpu.memory_space<vmem>>, vector<4x4xf32>
      tpu.vector_store %arg6[%c0_21, %c0_22], %20 {strides = array<i32>} : memref<4x4xf32, #tpu.memory_space<vmem>>, vector<4x4xf32>,
    } else {
    }
    %c0 = arith.constant 0 : index
    %c0_1 = arith.constant 0 : index
    %c0_2 = arith.constant 0 : index
    %3 = vector.load %arg2[%c0, %c0_1, %c0_2] : memref<1x4x256xf32, #tpu.memory_space<vmem>>, vector<1x4x256xf32>
    %4 = vector.shape_cast %3 : vector<1x4x256xf32> to vector<4x256xf32>
    %c0_3 = arith.constant 0 : index
    %c0_4 = arith.constant 0 : index
    %c0_5 = arith.constant 0 : index
    %5 = vector.load %arg3[%c0_3, %c0_4, %c0_5] : memref<1x4x256xf32, #tpu.memory_space<vmem>>, vector<1x4x256xf32>
    %6 = vector.shape_cast %5 : vector<1x4x256xf32> to vector<4x256xf32>
    %c0_6 = arith.constant 0 : index
    %c0_7 = arith.constant 0 : index
    %7 = vector.load %arg5[%c0_6, %c0_7] : memref<4x4xf32, #tpu.memory_space<vmem>>, vector<4x4xf32>
    %cst = arith.constant dense<0.000000e+00> : vector<4x4xf32>
    %8 = tpu.matmul %4, %4, %cst {dimension_numbers = #tpu.dot_dimension_numbers<[1], [1], [0], [0], [0, 0, 1, 0], [], []>} : vector<4x256xf32>, vector<4x256xf32>, vector<4x4xf32> -> vector<4x4xf32>
    %9 = arith.addf %7, %8 : vector<4x4xf32>
    %c0_8 = arith.constant 0 : index
    %c0_9 = arith.constant 0 : index
    %10 = vector.load %arg5[%c0_8, %c0_9] : memref<4x4xf32, #tpu.memory_space<vmem>>, vector<4x4xf32>
    tpu.vector_store %arg5[%c0_8, %c0_9], %9 {strides = array<i32>} : memref<4x4xf32, #tpu.memory_space<vmem>>, vector<4x4xf32>,
    %c0_10 = arith.constant 0 : index
    %c0_11 = arith.constant 0 : index
    %11 = vector.load %arg6[%c0_10, %c0_11] : memref<4x4xf32, #tpu.memory_space<vmem>>, vector<4x4xf32>
    %cst_12 = arith.constant dense<0.000000e+00> : vector<4x4xf32>
    %12 = tpu.matmul %6, %6, %cst_12 {dimension_numbers = #tpu.dot_dimension_numbers<[1], [1], [0], [0], [0, 0, 1, 0], [], []>} : vector<4x256xf32>, vector<4x256xf32>, vector<4x4xf32> -> vector<4x4xf32>
    %13 = arith.addf %11, %12 : vector<4x4xf32>
    %c0_13 = arith.constant 0 : index
    %c0_14 = arith.constant 0 : index
    %14 = vector.load %arg6[%c0_13, %c0_14] : memref<4x4xf32, #tpu.memory_space<vmem>>, vector<4x4xf32>
    tpu.vector_store %arg6[%c0_13, %c0_14], %13 {strides = array<i32>} : memref<4x4xf32, #tpu.memory_space<vmem>>, vector<4x4xf32>,
    %c0_i32_15 = arith.constant 0 : i32
    %15 = arith.cmpi eq, %arg1, %c0_i32_15 : i32
    %16 = arith.extui %15 : i1 to i32
    %c0_i32_16 = arith.constant 0 : i32
    %17 = arith.cmpi ne, %16, %c0_i32_16 : i32
    scf.if %17 {
      %c0_17 = arith.constant 0 : index
      %c0_18 = arith.constant 0 : index
      %18 = vector.load %arg5[%c0_17, %c0_18] : memref<4x4xf32, #tpu.memory_space<vmem>>, vector<4x4xf32>
      %c0_19 = arith.constant 0 : index
      %c0_20 = arith.constant 0 : index
      %19 = vector.load %arg6[%c0_19, %c0_20] : memref<4x4xf32, #tpu.memory_space<vmem>>, vector<4x4xf32>
      %20 = tpu.iota {dimensions = array<i32: 0>} : vector<4x4xi32>
      %21 = tpu.iota {dimensions = array<i32: 1>} : vector<4x4xi32>
      %22 = arith.cmpi eq, %20, %21 : vector<4x4xi32>
      %cst_21 = arith.constant 0.000000e+00 : f32
      %23 = vector.broadcast %cst_21 : f32 to vector<4x4xf32>
      %24 = arith.select %22, %18, %23 : vector<4x4xi1>, vector<4x4xf32>
      %cst_22 = arith.constant 0.000000e+00 : f32
      %25 = vector.broadcast %cst_22 : f32 to vector<4x4xf32>
      %26 = arith.select %22, %19, %25 : vector<4x4xi1>, vector<4x4xf32>
      %cst_23 = arith.constant dense<0.000000e+00> : vector<4xf32>
      %27 = vector.multi_reduction <add>, %24, %cst_23 [1] : vector<4x4xf32> to vector<4xf32>
      %28 = vector.shape_cast %27 : vector<4xf32> to vector<4x1xf32>
      %cst_24 = arith.constant 1.000000e-24 : f32
      %29 = vector.broadcast %cst_24 : f32 to vector<4x1xf32>
      %30 = arith.maximumf %28, %29 : vector<4x1xf32>
      %31 = math.rsqrt %30 : vector<4x1xf32>
      %cst_25 = arith.constant dense<0.000000e+00> : vector<4xf32>
      %32 = vector.multi_reduction <add>, %24, %cst_25 [0] : vector<4x4xf32> to vector<4xf32>
      %33 = vector.shape_cast %32 : vector<4xf32> to vector<1x4xf32>
      %cst_26 = arith.constant 1.000000e-24 : f32
      %34 = vector.broadcast %cst_26 : f32 to vector<1x4xf32>
      %35 = arith.maximumf %33, %34 : vector<1x4xf32>
      %36 = math.rsqrt %35 : vector<1x4xf32>
      %cst_27 = arith.constant dense<0.000000e+00> : vector<4xf32>
      %37 = vector.multi_reduction <add>, %26, %cst_27 [1] : vector<4x4xf32> to vector<4xf32>
      %38 = vector.shape_cast %37 : vector<4xf32> to vector<4x1xf32>
      %cst_28 = arith.constant 1.000000e-24 : f32
      %39 = vector.broadcast %cst_28 : f32 to vector<4x1xf32>
      %40 = arith.maximumf %38, %39 : vector<4x1xf32>
      %41 = math.rsqrt %40 : vector<4x1xf32>
      %cst_29 = arith.constant dense<0.000000e+00> : vector<4xf32>
      %42 = vector.multi_reduction <add>, %26, %cst_29 [0] : vector<4x4xf32> to vector<4xf32>
      %43 = vector.shape_cast %42 : vector<4xf32> to vector<1x4xf32>
      %cst_30 = arith.constant 1.000000e-24 : f32
      %44 = vector.broadcast %cst_30 : f32 to vector<1x4xf32>
      %45 = arith.maximumf %43, %44 : vector<1x4xf32>
      %46 = math.rsqrt %45 : vector<1x4xf32>
      %47 = vector.broadcast %31 : vector<4x1xf32> to vector<4x4xf32>
      %48 = arith.mulf %18, %47 : vector<4x4xf32>
      %49 = vector.broadcast %36 : vector<1x4xf32> to vector<4x4xf32>
      %50 = arith.mulf %48, %49 : vector<4x4xf32>
      %51 = vector.broadcast %41 : vector<4x1xf32> to vector<4x4xf32>
      %52 = arith.mulf %19, %51 : vector<4x4xf32>
      %53 = vector.broadcast %46 : vector<1x4xf32> to vector<4x4xf32>
      %54 = arith.mulf %52, %53 : vector<4x4xf32>
      %55 = arith.subf %50, %54 : vector<4x4xf32>
      %56 = arith.mulf %55, %55 : vector<4x4xf32>
      %57 = vector.shape_cast %56 : vector<4x4xf32> to vector<1x4x4xf32>
      %cst_31 = arith.constant dense<0.000000e+00> : vector<1xf32>
      %58 = vector.multi_reduction <add>, %57, %cst_31 [1, 2] : vector<1x4x4xf32> to vector<1xf32>
      %59 = vector.shape_cast %58 : vector<1xf32> to vector<1x1x1xf32>
      %60 = vector.extract %59[0, 0, 0] : f32 from vector<1x1x1xf32>
      %61 = vector.broadcast %60 : f32 to vector<1x1x128xf32>
      %c0_32 = arith.constant 0 : index
      %c0_33 = arith.constant 0 : index
      %c0_34 = arith.constant 0 : index
      %62 = vector.load %arg4[%c0_32, %c0_33, %c0_34] : memref<1x1x128xf32, #tpu.memory_space<vmem>>, vector<1x1x128xf32>
      tpu.vector_store %arg4[%c0_32, %c0_33, %c0_34], %61 {strides = array<i32>} : memref<1x1x128xf32, #tpu.memory_space<vmem>>, vector<1x1x128xf32>,
    } else {
    }
    return
  }
  func.func @transform_0(%arg0: i32, %arg1: i32) -> (i32, i32, i32) {
    %c0_i32 = arith.constant 0 : i32
    %c0_i32_0 = arith.constant 0 : i32
    return %arg0, %c0_i32, %arg1 : i32, i32, i32
  }
  func.func @transform_1(%arg0: i32, %arg1: i32) -> (i32, i32, i32) {
    %c0_i32 = arith.constant 0 : i32
    %c0_i32_0 = arith.constant 0 : i32
    return %arg0, %c0_i32, %arg1 : i32, i32, i32
  }
  func.func @transform_2(%arg0: i32, %arg1: i32) -> (i32, i32, i32) {
    %c0_i32 = arith.constant 0 : i32
    %c0_i32_0 = arith.constant 0 : i32
    %c0_i32_1 = arith.constant 0 : i32
    return %arg0, %c0_i32, %c0_i32_0 : i32, i32, i32
  }
}

</mosaic_0001>

<llo_original>
// kernel: tpu_custom_call.1
$region0: #{tpu_custom_call.1}
  #allocation0 [shape = 'u32[]', space=smem, size = 0x4, offset = 0x4, fixed_abs, tag = 'smem constant byte address 0x4 - core index']
  #allocation1 [shape = 'u32[144,128]{1,0:T(1,128)}', space=vmem, size = 0x12000, scoped, tag = 'internal scratch']
  #allocation2 [shape = 'f32[4,4]{1,0:T(4,128)}', space=vmem, size = 0x800, scoped, tag = 'scratch operand']
  #allocation3 [shape = 'f32[4,4]{1,0:T(4,128)}', space=vmem, size = 0x800, scoped, tag = 'scratch operand']
  %s0 = inlined_call_operand.hbm [shape: f32[2,4,256], index: 0, kind: input, shape index: {}]
  %s1 = inlined_call_operand.hbm [shape: f32[2,4,256], index: 1, kind: input, shape index: {}]
  %s2 = inlined_call_operand.hbm [shape: f32[2,1,128], index: 2, kind: output, shape index: {}]
  %s3 = sld [smem:[#allocation0]]
  $region57: #{tpu_custom_call.1} parent=0
    _
  %s5 = ssub.s32 1, %s3
  %s6 = scalar_select 0, %s5, %s3
  $region1: #{tpu_custom_call.1} parent=0
    #allocation4 [shape = 'u8[8192]{0}', space=vmem, size = 0x2000, scoped, tag = 'input window, operand 0']
    #allocation5 [shape = 's32[2]{0}', space=sflag, size = 0x8, scoped, tag = 'scoped memory for tpu_custom_call.1']
    #allocation6 [shape = 's32[2]{0}', space=sflag, size = 0x8, scoped, tag = 'scoped memory for tpu_custom_call.1']
    #allocation7 [shape = 'u8[8192]{0}', space=vmem, size = 0x2000, scoped, tag = 'input window, operand 1']
    #allocation8 [shape = 's32[2]{0}', space=sflag, size = 0x8, scoped, tag = 'scoped memory for tpu_custom_call.1']
    #allocation9 [shape = 'u8[1024]{0}', space=vmem, size = 0x400, scoped, tag = 'output window, operand 0']
    %7 = vsyncpa [#allocation5], 0
    %s8 = scalar_lea.sflag [#allocation5], 1
    %9 = vsyncpa %s8, 0
    %10 = vsyncpa [#allocation8], 0
    %s11 = scalar_lea.sflag [#allocation8], 1
    %12 = vsyncpa %s11, 0
    %13 = vsyncpa [#allocation6], 0
    %s14 = scalar_lea.sflag [#allocation6], 1
    %15 = vsyncpa %s14, 0
    loop: start=0, step=1, limit=4
    $region2: #{tpu_custom_call.1} parent=1 // loop_pre_header
      _
    $region3: #{tpu_custom_call.1} parent=1 // loop_header
      %s17 = sphi 0, %s21
      %p18 = scmp.ge.s32.totalorder %s17, 4
      %s24 = sphi 0, %s36
      %s25 = sphi 0, %s32
      %s26 = sphi 0, %s24
      %s27 = sphi 0, %s25
      %s28 = sphi 0, %s26
      %s29 = sphi 0, %s27
      %s41 = sphi 0, %s43
      %s44 = sphi 0, %s41
      %s45 = sphi 0, %s44
      %s61 = sphi 0, %s45
      %s69 = sphi 0, %s71
      %s72 = sphi 0, %s69
      %s73 = sphi 0, %s72
      %s89 = sphi 0, %s73
      %s95 = sphi 0, %s97
      %s98 = sphi 0, %s95
      %s99 = sphi 0, %s98
      %s115 = sphi 0, %s99
    $region4: #{tpu_custom_call.1} parent=1 // loop_header_branch
      %20 = sbr.rel (%p18) target = $region8
    $region5: #{tpu_custom_call.1} parent=1 // loop_body
      %s22 = ssub.s32 %s17, 1
      %s23 = ssub.s32 %s17, 2
      %s30 = sadd.s32 1, %s25
      %p31 = scmp.ge.s32.totalorder %s30, 1
      %s32 = scalar_select %p31, 0, %s30
      %s33 = sadd.s32 1, %s24
      %s34 = scalar_select %p31, %s33, %s24
      %p35 = scmp.ge.s32.totalorder %s34, 2
      %s36 = scalar_select %p35, 0, %s34
      %s37 = ssub.s32 %s24, %s36
      %s38 = ssub.s32 %s25, %s32
      %s39 = sor.u32 %s37, %s38
      %p40 = scmp.eq.s32.totalorder %s39, 0
      %s42 = sadd.s32 %s41, 1
      %s43 = scalar_select %p40, %s41, %s42
      %p46 = pneg %p40
      %p47 = scmp.eq.s32.totalorder %s17, 1
      %p48 = por %p46, %p47
      %p49 = scmp.ne.s32.totalorder %s41, %s44
      %p50 = scmp.eq.s32.totalorder %s17, 0
      %p51 = por %p49, %p50
      %p52 = scmp.ne.s32.totalorder %s41, %s44
      %p53 = scmp.eq.s32.totalorder %s22, 1
      %p54 = por %p52, %p53
      %p55 = scmp.ne.s32.totalorder %s44, %s45
      %p56 = scmp.eq.s32.totalorder %s22, 0
      %p57 = por %p55, %p56
      %p58 = scmp.ne.s32.totalorder %s44, %s45
      %p59 = scmp.eq.s32.totalorder %s23, 1
      %p60 = por %p58, %p59
      %p62 = scmp.ne.s32.totalorder %s45, %s61
      %p63 = scmp.eq.s32.totalorder %s23, 0
      %p64 = por %p62, %p63
      %s65 = ssub.s32 %s24, %s36
      %s66 = ssub.s32 %s25, %s32
      %s67 = sor.u32 %s65, %s66
      %p68 = scmp.eq.s32.totalorder %s67, 0
      %s70 = sadd.s32 %s69, 1
      %s71 = scalar_select %p68, %s69, %s70
      %p74 = pneg %p68
      %p75 = scmp.eq.s32.totalorder %s17, 1
      %p76 = por %p74, %p75
      %p77 = scmp.ne.s32.totalorder %s69, %s72
      %p78 = scmp.eq.s32.totalorder %s17, 0
      %p79 = por %p77, %p78
      %p80 = scmp.ne.s32.totalorder %s69, %s72
      %p81 = scmp.eq.s32.totalorder %s22, 1
      %p82 = por %p80, %p81
      %p83 = scmp.ne.s32.totalorder %s72, %s73
      %p84 = scmp.eq.s32.totalorder %s22, 0
      %p85 = por %p83, %p84
      %p86 = scmp.ne.s32.totalorder %s72, %s73
      %p87 = scmp.eq.s32.totalorder %s23, 1
      %p88 = por %p86, %p87
      %p90 = scmp.ne.s32.totalorder %s73, %s89
      %p91 = scmp.eq.s32.totalorder %s23, 0
      %p92 = por %p90, %p91
      %s93 = ssub.s32 %s24, %s36
      %p94 = scmp.eq.s32.totalorder %s93, 0
      %s96 = sadd.s32 %s95, 1
      %s97 = scalar_select %p94, %s95, %s96
      %p100 = pneg %p94
      %p101 = scmp.eq.s32.totalorder %s17, 1
      %p102 = por %p100, %p101
      %p103 = scmp.ne.s32.totalorder %s95, %s98
      %p104 = scmp.eq.s32.totalorder %s17, 0
      %p105 = por %p103, %p104
      %p106 = scmp.ne.s32.totalorder %s95, %s98
      %p107 = scmp.eq.s32.totalorder %s22, 1
      %p108 = por %p106, %p107
      %p109 = scmp.ne.s32.totalorder %s98, %s99
      %p110 = scmp.eq.s32.totalorder %s22, 0
      %p111 = por %p109, %p110
      %p112 = scmp.ne.s32.totalorder %s98, %s99
      %p113 = scmp.eq.s32.totalorder %s23, 1
      %p114 = por %p112, %p113
      %p116 = scmp.ne.s32.totalorder %s99, %s115
      %p117 = scmp.eq.s32.totalorder %s23, 0
      %p118 = por %p116, %p117
      %p119 = scmp.le.s32.totalorder 1, %s17
      %p120 = scmp.lt.s32.totalorder %s17, 3
      %p121 = pnand %p119, %p120
      %p122 = pneg %p121
      // Predicated region
      $region9: #{tpu_custom_call.1} parent=5 // pred_check
        _
      $region10: #{tpu_custom_call.1} parent=5 // pred_check_branch
        %124 = sbr.rel (%p121) target = $region12
      $region11: #{tpu_custom_call.1} parent=5 // pred_region
        %s125 = ssub.s32 %s17, 1
      $region12: #{tpu_custom_call.1} parent=5 // pred_fallthru
        _
      %p126 = scmp.lt.s32.totalorder %s17, 2
      // Predicated region
      $region13: #{tpu_custom_call.1} parent=5 // pred_check
        %p127 = pneg %p126
      $region14: #{tpu_custom_call.1} parent=5 // pred_check_branch
        %129 = sbr.rel (%p127) target = $region16
      $region15: #{tpu_custom_call.1} parent=5 // pred_region
        // Predicated region
        $region17: #{tpu_custom_call.1} parent=15 // pred_check
          %p130 = pneg %p51
        $region18: #{tpu_custom_call.1} parent=15 // pred_check_branch
          %132 = sbr.rel (%p130) target = $region20
        $region19: #{tpu_custom_call.1} parent=15 // pred_region
          %s133 = sand.u32 %s41, 1
          %s134 = scalar_lea.sflag [#allocation5], %s133
          %s135 = sand.u32 %s41, 1
          %s136 = smul.addr %s135, 8
          %s137 = scalar_lea.vmem [#allocation4], %s136
          %s138 = smul.u32 2, %s25
          %s140 = ssub.s32 128, 128
          %141 = vsyncadd %s134, %s140
          %s142 = smul.addr %s24, 2
          %s143 = sadd.s32 %s138, %s142
          %s144 = smul.addr %s143, 64
          %s145 = scalar_lea.hbm %s0, %s144
          %s147 = sshll.u32 %s137, 4
          %s148 = int_to_ptr.vmem [resolvable:$true] %s147
          %150 = dma.hbm_to_vmem [thread:$0]  %s145, 128, %s148, %s134
        $region20: #{tpu_custom_call.1} parent=15 // pred_fallthru
          _
        // Predicated region
        $region21: #{tpu_custom_call.1} parent=15 // pred_check
          %p151 = pneg %p79
        $region22: #{tpu_custom_call.1} parent=15 // pred_check_branch
          %153 = sbr.rel (%p151) target = $region24
        $region23: #{tpu_custom_call.1} parent=15 // pred_region
          %s154 = sand.u32 %s69, 1
          %s155 = scalar_lea.sflag [#allocation8], %s154
          %s156 = sand.u32 %s69, 1
          %s157 = smul.addr %s156, 8
          %s158 = scalar_lea.vmem [#allocation7], %s157
          %s159 = smul.u32 2, %s25
          %s161 = ssub.s32 128, 128
          %162 = vsyncadd %s155, %s161
          %s163 = smul.addr %s24, 2
          %s164 = sadd.s32 %s159, %s163
          %s165 = smul.addr %s164, 64
          %s166 = scalar_lea.hbm %s1, %s165
          %s168 = sshll.u32 %s158, 4
          %s169 = int_to_ptr.vmem [resolvable:$true] %s168
          %171 = dma.hbm_to_vmem [thread:$0]  %s166, 128, %s169, %s155
        $region24: #{tpu_custom_call.1} parent=15 // pred_fallthru
          _
      $region16: #{tpu_custom_call.1} parent=5 // pred_fallthru
        _
      %p172 = scmp.le.s32.totalorder 1, %s17
      %p173 = scmp.lt.s32.totalorder %s17, 3
      %p174 = pnand %p172, %p173
      %p175 = pneg %p174
      // Predicated region
      $region25: #{tpu_custom_call.1} parent=5 // pred_check
        _
      $region26: #{tpu_custom_call.1} parent=5 // pred_check_branch
        %177 = sbr.rel (%p174) target = $region28
      $region27: #{tpu_custom_call.1} parent=5 // pred_region
        %s178 = ssub.s32 %s17, 1
        %s179 = sand.u32 %s44, 1
        %s180 = scalar_lea.sflag [#allocation5], %s179
        %s181 = sand.u32 %s44, 1
        %s182 = smul.addr %s181, 8
        %s183 = scalar_lea.vmem [#allocation4], %s182
        // Predicated region
        $region29: #{tpu_custom_call.1} parent=27 // pred_check
          %p184 = pneg %p57
        $region30: #{tpu_custom_call.1} parent=27 // pred_check_branch
          %186 = sbr.rel (%p184) target = $region32
        $region31: #{tpu_custom_call.1} parent=27 // pred_region
          %187 = dma.done %s180, 128
        $region32: #{tpu_custom_call.1} parent=27 // pred_fallthru
          _
        %s188 = sand.u32 %s72, 1
        %s189 = scalar_lea.sflag [#allocation8], %s188
        %s190 = sand.u32 %s72, 1
        %s191 = smul.addr %s190, 8
        %s192 = scalar_lea.vmem [#allocation7], %s191
        // Predicated region
        $region33: #{tpu_custom_call.1} parent=27 // pred_check
          %p193 = pneg %p85
        $region34: #{tpu_custom_call.1} parent=27 // pred_check_branch
          %195 = sbr.rel (%p193) target = $region36
        $region35: #{tpu_custom_call.1} parent=27 // pred_region
          %196 = dma.done %s189, 128
        $region36: #{tpu_custom_call.1} parent=27 // pred_fallthru
          _
        %s197 = sand.u32 %s44, 1
        %s198 = scalar_lea.sflag [#allocation5], %s197
        %s199 = sand.u32 %s44, 1
        %s200 = smul.addr %s199, 8
        %s201 = scalar_lea.vmem [#allocation4], %s200
        %p202 = pneg %p57
        %p203 = pneg %p54
        %s204 = sand.u32 %s72, 1
        %s205 = scalar_lea.sflag [#allocation8], %s204
        %s206 = sand.u32 %s72, 1
        %s207 = smul.addr %s206, 8
        %s208 = scalar_lea.vmem [#allocation7], %s207
        %p209 = pneg %p85
        %p210 = pneg %p82
        %p211 = pneg %p111
        %p212 = pneg %p108
        %s213 = sand.u32 %s98, 1
        %s214 = scalar_lea.sflag [#allocation6], %s213
        %s215 = sand.u32 %s98, 1
        %s216 = scalar_lea.vmem [#allocation9], %s215
        %s217 = smul.u32 2, %s27
        %s218 = smul.u32 2, %s27
        %p219 = scmp.eq.s32.totalorder %s27, 0
        // Predicated region
        $region37: #{tpu_custom_call.1} parent=27 // pred_check
          %p220 = pneg %p219
        $region38: #{tpu_custom_call.1} parent=27 // pred_check_branch
          %222 = sbr.rel (%p220) target = $region40
        $region39: #{tpu_custom_call.1} parent=27 // pred_region
          %vm223 = vcmask 27648
          %224 = vst.msk [vmem:[#allocation2] sm:$0xf] %vm223, 0.0
          %225 = vst.msk [vmem:[#allocation3] sm:$0xf] %vm223, 0.0
        $region40: #{tpu_custom_call.1} parent=27 // pred_fallthru
          _
        %v226 = vld [vmem:[%s183] sm:$0xff]
        %v227 = vld [vmem:[%s192] sm:$0xff]
        %v228 = vld [vmem:[#allocation2] sm:$0xf]
        %v230 = vcombine.high %v226, %v226
        %232 = vmatprep.subr.mxu0 %v230
        %233 = vmatpush1.xpose.msra.mxu0 %v226
        %234 = vmatprep.subr.mxu0 0.0
        %235 = vmatpush1.xpose.msra.mxu0 0.0
        %236 = vmatprep.subr.mxu0 0.0
        %237 = vmatpush1.xpose.msra.mxu0 0.0
        %238 = vmatprep.subr.mxu0 0.0
        %239 = vmatpush1.xpose.msra.mxu0 0.0
        %240 = vmatprep.subr.mxu0 0.0
        %241 = vmatpush1.xpose.msra.mxu0 0.0
        %242 = vmatprep.subr.mxu0 0.0
        %243 = vmatpush1.xpose.msra.mxu0 0.0
        %244 = vmatprep.subr.mxu0 0.0
        %245 = vmatpush1.xpose.msra.mxu0 0.0
        %246 = vmatprep.subr.mxu0 0.0
        %247 = vmatpush1.xpose.msra.mxu0 0.0
        %248 = vmatprep.subr.mxu0 0.0
        %249 = vmatpush1.xpose.msra.mxu0 0.0
        %250 = vmatprep.subr.mxu0 0.0
        %251 = vmatpush1.xpose.msra.mxu0 0.0
        %252 = vmatprep.subr.mxu0 0.0
        %253 = vmatpush1.xpose.msra.mxu0 0.0
        %254 = vmatprep.subr.mxu0 0.0
        %255 = vmatpush1.xpose.msra.mxu0 0.0
        %256 = vmatprep.subr.mxu0 0.0
        %257 = vmatpush1.xpose.msra.mxu0 0.0
        %258 = vmatprep.subr.mxu0 0.0
        %259 = vmatpush1.xpose.msra.mxu0 0.0
        %260 = vmatprep.subr.mxu0 0.0
        %261 = vmatpush1.xpose.msra.mxu0 0.0
        %262 = vmatprep.subr.mxu0 0.0
        %263 = vmatpush1.xpose.msra.mxu0 0.0
        %264 = vmatprep.subr.mxu0 0.0
        %265 = vmatpush1.xpose.msra.mxu0 0.0
        %266 = vmatprep.subr.mxu0 0.0
        %267 = vmatpush1.xpose.msra.mxu0 0.0
        %268 = vmatprep.subr.mxu0 0.0
        %269 = vmatpush1.xpose.msra.mxu0 0.0
        %270 = vmatprep.subr.mxu0 0.0
        %271 = vmatpush1.xpose.msra.mxu0 0.0
        %272 = vmatprep.subr.mxu0 0.0
        %273 = vmatpush1.xpose.msra.mxu0 0.0
        %274 = vmatprep.subr.mxu0 0.0
        %275 = vmatpush1.xpose.msra.mxu0 0.0
        %276 = vmatprep.subr.mxu0 0.0
        %277 = vmatpush1.xpose.msra.mxu0 0.0
        %278 = vmatprep.subr.mxu0 0.0
        %279 = vmatpush1.xpose.msra.mxu0 0.0
        %280 = vmatprep.subr.mxu0 0.0
        %281 = vmatpush1.xpose.msra.mxu0 0.0
        %282 = vmatprep.subr.mxu0 0.0
        %283 = vmatpush1.xpose.msra.mxu0 0.0
        %284 = vmatprep.subr.mxu0 0.0
        %285 = vmatpush1.xpose.msra.mxu0 0.0
        %286 = vmatprep.subr.mxu0 0.0
        %287 = vmatpush1.xpose.msra.mxu0 0.0
        %288 = vmatprep.subr.mxu0 0.0
        %289 = vmatpush1.xpose.msra.mxu0 0.0
        %290 = vmatprep.subr.mxu0 0.0
        %291 = vmatpush1.xpose.msra.mxu0 0.0
        %292 = vmatprep.subr.mxu0 0.0
        %293 = vmatpush1.xpose.msra.mxu0 0.0
        %294 = vmatprep.subr.mxu0 0.0
        %295 = vmatpush1.xpose.msra.mxu0 0.0
        %296 = vmatprep.mubr.f32.mxu0 %v230
        %297 = vmatmul.mubr.f32.gmra.mrb[0].mxu0 %v226
        %v298 = vpop.f32.mrb[0].mxu0
        %v299 = vadd.f32 0.0, %v298
        %v300 = vpop.f32.mrb[0].mxu0
        %301 = vdwg.mxu0
        %v302 = vadd.f32 %v228, %v299
        %vm303 = vcmask 27648
        %304 = vst.msk [vmem:[#allocation2] sm:$0xf] %vm303, %v302
        %v305 = vld [vmem:[#allocation3] sm:$0xf]
        %v307 = vcombine.high %v227, %v227
        %309 = vmatprep.subr.mxu0 %v307
        %310 = vmatpush1.xpose.msra.mxu0 %v227
        %311 = vmatprep.subr.mxu0 0.0
        %312 = vmatpush1.xpose.msra.mxu0 0.0
        %313 = vmatprep.subr.mxu0 0.0
        %314 = vmatpush1.xpose.msra.mxu0 0.0
        %315 = vmatprep.subr.mxu0 0.0
        %316 = vmatpush1.xpose.msra.mxu0 0.0
        %317 = vmatprep.subr.mxu0 0.0
        %318 = vmatpush1.xpose.msra.mxu0 0.0
        %319 = vmatprep.subr.mxu0 0.0
        %320 = vmatpush1.xpose.msra.mxu0 0.0
        %321 = vmatprep.subr.mxu0 0.0
        %322 = vmatpush1.xpose.msra.mxu0 0.0
        %323 = vmatprep.subr.mxu0 0.0
        %324 = vmatpush1.xpose.msra.mxu0 0.0
        %325 = vmatprep.subr.mxu0 0.0
        %326 = vmatpush1.xpose.msra.mxu0 0.0
        %327 = vmatprep.subr.mxu0 0.0
        %328 = vmatpush1.xpose.msra.mxu0 0.0
        %329 = vmatprep.subr.mxu0 0.0
        %330 = vmatpush1.xpose.msra.mxu0 0.0
        %331 = vmatprep.subr.mxu0 0.0
        %332 = vmatpush1.xpose.msra.mxu0 0.0
        %333 = vmatprep.subr.mxu0 0.0
        %334 = vmatpush1.xpose.msra.mxu0 0.0
        %335 = vmatprep.subr.mxu0 0.0
        %336 = vmatpush1.xpose.msra.mxu0 0.0
        %337 = vmatprep.subr.mxu0 0.0
        %338 = vmatpush1.xpose.msra.mxu0 0.0
        %339 = vmatprep.subr.mxu0 0.0
        %340 = vmatpush1.xpose.msra.mxu0 0.0
        %341 = vmatprep.subr.mxu0 0.0
        %342 = vmatpush1.xpose.msra.mxu0 0.0
        %343 = vmatprep.subr.mxu0 0.0
        %344 = vmatpush1.xpose.msra.mxu0 0.0
        %345 = vmatprep.subr.mxu0 0.0
        %346 = vmatpush1.xpose.msra.mxu0 0.0
        %347 = vmatprep.subr.mxu0 0.0
        %348 = vmatpush1.xpose.msra.mxu0 0.0
        %349 = vmatprep.subr.mxu0 0.0
        %350 = vmatpush1.xpose.msra.mxu0 0.0
        %351 = vmatprep.subr.mxu0 0.0
        %352 = vmatpush1.xpose.msra.mxu0 0.0
        %353 = vmatprep.subr.mxu0 0.0
        %354 = vmatpush1.xpose.msra.mxu0 0.0
        %355 = vmatprep.subr.mxu0 0.0
        %356 = vmatpush1.xpose.msra.mxu0 0.0
        %357 = vmatprep.subr.mxu0 0.0
        %358 = vmatpush1.xpose.msra.mxu0 0.0
        %359 = vmatprep.subr.mxu0 0.0
        %360 = vmatpush1.xpose.msra.mxu0 0.0
        %361 = vmatprep.subr.mxu0 0.0
        %362 = vmatpush1.xpose.msra.mxu0 0.0
        %363 = vmatprep.subr.mxu0 0.0
        %364 = vmatpush1.xpose.msra.mxu0 0.0
        %365 = vmatprep.subr.mxu0 0.0
        %366 = vmatpush1.xpose.msra.mxu0 0.0
        %367 = vmatprep.subr.mxu0 0.0
        %368 = vmatpush1.xpose.msra.mxu0 0.0
        %369 = vmatprep.subr.mxu0 0.0
        %370 = vmatpush1.xpose.msra.mxu0 0.0
        %371 = vmatprep.subr.mxu0 0.0
        %372 = vmatpush1.xpose.msra.mxu0 0.0
        %373 = vmatprep.mubr.f32.mxu0 %v307
        %374 = vmatmul.mubr.f32.gmra.mrb[0].mxu0 %v227
        %v375 = vpop.f32.mrb[0].mxu0
        %v376 = vadd.f32 0.0, %v375
        %v377 = vpop.f32.mrb[0].mxu0
        %378 = vdwg.mxu0
        %v379 = vadd.f32 %v305, %v376
        %380 = vst.msk [vmem:[#allocation3] sm:$0xf] %vm303, %v379
        // Predicated region
        $region41: #{tpu_custom_call.1} parent=27 // pred_check
          %p381 = pneg %p219
        $region42: #{tpu_custom_call.1} parent=27 // pred_check_branch
          %383 = sbr.rel (%p381) target = $region44
        $region43: #{tpu_custom_call.1} parent=27 // pred_region
          %v384 = vld [vmem:[#allocation2] sm:$0xf]
          %v385 = vld [vmem:[#allocation3] sm:$0xf]
          %v386 = vlaneseq
          %v387 = vshrl.u32 %v386, 7
          %v388 = vlaneseq
          %v389 = vand.u32 %v388, 127
          %vm390 = vcmp.eq.s32.totalorder %v387, %v389
          %v391 = vsel %vm390, %v384, 0.0
          %v392 = vsel %vm390, %v385, 0.0
          %v393 = vsel %vm303, %v391, 0.0
          %394 = vadd.xlane.f32.xlu0 %v393
          %v395 = vpop.xlane.xlu0 %394
          %v396 = vmax.f32 %v395, 1e-24
          %v397 = vrsqrt.pop %v396
          %v398 = vrot.slane %v393, 4
          %v399 = vadd.f32 %v393, %v398
          %v400 = vrot.slane %v399, 2
          %v401 = vadd.f32 %v399, %v400
          %v402 = vrot.slane %v401, 1
          %v403 = vadd.f32 %v401, %v402
          %v404 = vmax.f32 %v403, 1e-24
          %v405 = vrsqrt.pop %v404
          %v406 = vsel %vm303, %v392, 0.0
          %407 = vadd.xlane.f32.xlu0 %v406
          %v408 = vpop.xlane.xlu0 %407
          %v409 = vmax.f32 %v408, 1e-24
          %v410 = vrsqrt.pop %v409
          %v411 = vrot.slane %v406, 4
          %v412 = vadd.f32 %v406, %v411
          %v413 = vrot.slane %v412, 2
          %v414 = vadd.f32 %v412, %v413
          %v415 = vrot.slane %v414, 1
          %v416 = vadd.f32 %v414, %v415
          %v417 = vmax.f32 %v416, 1e-24
          %v418 = vrsqrt.pop %v417
          %v419 = vmul.f32 %v384, %v397
          %v420 = vmul.f32 %v419, %v405
          %v421 = vmul.f32 %v385, %v410
          %v422 = vmul.f32 %v421, %v418
          %v423 = vsub.f32 %v420, %v422
          %v424 = vmul.f32 %v423, %v423
          %v425 = vsel %vm303, %v424, 0.0
          %426 = vadd.xlane.f32.xlu0 %v425
          %v427 = vpop.xlane.xlu0 %426
          %v428 = vrot.slane %v427, 4
          %v429 = vadd.f32 %v427, %v428
          %v430 = vrot.slane %v429, 2
          %v431 = vadd.f32 %v429, %v430
          %v432 = vrot.slane %v431, 1
          %v433 = vadd.f32 %v431, %v432
          %s434 = vtos %v433
          %v435 = vstv %s434
          %436 = vst [vmem:[%s216] sm:$0x1] %v435
        $region44: #{tpu_custom_call.1} parent=27 // pred_fallthru
          _
        %s437 = sand.u32 %s98, 1
        %s438 = scalar_lea.sflag [#allocation6], %s437
        %s439 = sand.u32 %s98, 1
        %s440 = scalar_lea.vmem [#allocation9], %s439
        // Predicated region
        $region45: #{tpu_custom_call.1} parent=27 // pred_check
          %p441 = pneg %p108
        $region46: #{tpu_custom_call.1} parent=27 // pred_check_branch
          %443 = sbr.rel (%p441) target = $region48
        $region47: #{tpu_custom_call.1} parent=27 // pred_region
          %s445 = ssub.s32 16, 16
          %446 = vsyncadd %s438, %s445
          %s447 = smul.addr %s26, 16
          %s448 = scalar_lea.hbm %s2, %s447
          %s450 = sshll.u32 %s440, 4
          %s451 = int_to_ptr.vmem [resolvable:$true] %s450
          %453 = dma.vmem_to_hbm [thread:$0]  %s451, 16, %s448, %s438
        $region48: #{tpu_custom_call.1} parent=27 // pred_fallthru
          _
      $region28: #{tpu_custom_call.1} parent=5 // pred_fallthru
        _
      %p454 = scmp.le.s32.totalorder 2, %s17
      // Predicated region
      $region49: #{tpu_custom_call.1} parent=5 // pred_check
        %p455 = pneg %p454
      $region50: #{tpu_custom_call.1} parent=5 // pred_check_branch
        %457 = sbr.rel (%p455) target = $region52
      $region51: #{tpu_custom_call.1} parent=5 // pred_region
        %s458 = ssub.s32 %s17, 2
        // Predicated region
        $region53: #{tpu_custom_call.1} parent=51 // pred_check
          %p459 = pneg %p114
        $region54: #{tpu_custom_call.1} parent=51 // pred_check_branch
          %461 = sbr.rel (%p459) target = $region56
        $region55: #{tpu_custom_call.1} parent=51 // pred_region
          %s462 = sand.u32 %s99, 1
          %s463 = scalar_lea.sflag [#allocation6], %s462
          %s464 = sand.u32 %s99, 1
          %s465 = scalar_lea.vmem [#allocation9], %s464
          %466 = dma.done %s463, 16
        $region56: #{tpu_custom_call.1} parent=51 // pred_fallthru
          _
      $region52: #{tpu_custom_call.1} parent=5 // pred_fallthru
        _
    $region6: #{tpu_custom_call.1} parent=1 // loop_footer
      %s21 = sadd.s32 1, %s17
    $region7: #{tpu_custom_call.1} parent=1 // loop_footer_branch
      %16 = sbr.rel target = $region3
    $region8: #{tpu_custom_call.1} parent=1 // loop_exit
      _
    %467 = vsyncpa [#allocation5], 1
    %s468 = scalar_lea.sflag [#allocation5], 1
    %469 = vsyncpa %s468, 1
    %470 = vsyncpa [#allocation8], 1
    %s471 = scalar_lea.sflag [#allocation8], 1
    %472 = vsyncpa %s471, 1
    %473 = vsyncpa [#allocation6], 1
    %s474 = scalar_lea.sflag [#allocation6], 1
    %475 = vsyncpa %s474, 1

</llo_original>
